<compile_context>
chip_gen: v7x
topology: tpu7x:2x2x1
jax: 0.10.0
libtpu: 0.0.40
codegen_flags: <defaults>
</compile_context>

<pallas_src>
import functools

import jax
import jax.numpy as jnp
from jax import lax
from jax.experimental import pallas as pl
from jax.experimental.pallas import tpu as pltpu


def _sepconv_kernel(x_ref, wc_ref, o_ref, cols_ref, *,
                    Nb, K, stride, dilation, Wp, Qp, C_in_p):
    # x_ref   : (Nb, C_in_p, L)   padded input, (h, w) flattened on the lane axis
    # wc_ref  : (C_out, T)        fused depthwise*pointwise weights, T = K*K*C_in_p
    # o_ref   : (Nb, C_out, Qp)   flat output, q = h*Wp + w (valid for w < W_out)
    # cols_ref: (T, Nb*Qp)        im2col scratch (compute dtype)
    for nb in range(Nb):                          # static; only emits slab stores
        xn = x_ref[nb] if stride != 1 else None
        for kh in range(K):
            for kw in range(K):
                tap = kh * K + kw
                off = dilation * (kh * Wp + kw)   # static lane offset
                if stride == 1:
                    slab = x_ref[nb, :, off:off + Qp]
                else:
                    # TODO(synk): strided lane slice; only stride=1 is exercised
                    # on hardware by this module's usage.
                    slab = lax.slice(xn, (0, off),
                                     (C_in_p, off + stride * (Qp - 1) + 1),
                                     (1, stride))
                cols_ref[tap * C_in_p:(tap + 1) * C_in_p,
                         nb * Qp:(nb + 1) * Qp] = slab
    # One deep MXU matmul over all Nb*Qp lanes; f32 accumulate.
    out = jnp.dot(wc_ref[...], cols_ref[...], preferred_element_type=jnp.float32)
    for nb in range(Nb):                          # 128-aligned lane slices
        o_ref[nb] = out[:, nb * Qp:(nb + 1) * Qp].astype(o_ref.dtype)


def _round_up(v, m):
    return (v + m - 1) // m * m


def _vmem_capacity_bytes():
    try:
        info = pltpu.get_tpu_info()
        for attr in ("vmem_capacity_bytes", "vmem_bytes"):
            v = getattr(info, attr, None)
            if v:
                return int(v)
    except Exception:
        pass
    return 64 << 20       # conservative default (v7x per-TC VMEM)


def separable_conv2d(x_nchw, w_dw, w_pw, *, stride=1, padding=1, dilation=1):
    """SeparableConv2d forward (torch semantics, bias=False).

    x_nchw : (N, C_in, H, W)
    w_dw   : (C_in, 1, K, K)      torch depthwise conv weight (groups=C_in)
    w_pw   : (C_out, C_in, 1, 1)  torch pointwise 1x1 conv weight
    returns: (N, C_out, H_out, W_out)  NCHW, matching torch
    """
    N, C_in, H, W = x_nchw.shape
    K = w_dw.shape[-1]
    C_out = w_pw.shape[0]

    H_out = (H + 2 * padding - dilation * (K - 1) - 1) // stride + 1
    W_out = (W + 2 * padding - dilation * (K - 1) - 1) // stride + 1
    Hp, Wp = H + 2 * padding, W + 2 * padding

    in_dtype = x_nchw.dtype
    compute_dtype = jnp.bfloat16 if in_dtype == jnp.bfloat16 else jnp.float32
    sublane = 16 if compute_dtype == jnp.bfloat16 else 8
    C_in_p = _round_up(C_in, sublane)             # sublane-tile aligned channels
    T = K * K * C_in_p                            # fused contraction depth

    # Flat output lane width per image (q = h*Wp + w), rounded to full 128 lanes
    # so all stores / result slices are lane-tile aligned and unmasked.
    Qp = _round_up(H_out * Wp, 128)
    # Input lane length so every tap window of length Qp stays in-bounds.
    max_off = dilation * (K - 1) * (Wp + 1)
    needed = max_off + stride * (Qp - 1) + 1
    extra = max(0, needed - Hp * Wp)
    extra_rows = -(-extra // Wp)                  # extra zero rows at the bottom
    L = (Hp + extra_rows) * Wp

    # ---- Fuse depthwise and pointwise weights (both linear => exact):
    #      W_comb[co, kh, kw, ci] = w_pw[co, ci] * w_dw[ci, kh, kw]
    wdw = jnp.transpose(w_dw[:, 0, :, :], (1, 2, 0)).astype(jnp.float32)  # (K,K,Cin)
    wpw = w_pw[:, :, 0, 0].astype(jnp.float32)                            # (Cout,Cin)
    wc = wpw[:, None, None, :] * wdw[None, :, :, :]                       # (Cout,K,K,Cin)
    wc = jnp.pad(wc, ((0, 0), (0, 0), (0, 0), (0, C_in_p - C_in)))
    wc = wc.reshape(C_out, T).astype(compute_dtype)   # t = (kh*K+kw)*C_in_p + ci

    # ---- Single pad op: channel pad + spatial halo + extra bottom rows, then
    #      flatten (h, w) onto the lane axis.  NCHW is kept end-to-end.
    xp = jnp.pad(x_nchw, ((0, 0), (0, C_in_p - C_in),
                          (padding, padding + extra_rows), (padding, padding)))
    xf = xp.reshape(N, C_in_p, L).astype(compute_dtype)

    itemsize = jnp.dtype(compute_dtype).itemsize
    out_itemsize = jnp.dtype(in_dtype).itemsize

    # Per-image VMEM cost: double-buffered in/out blocks + im2col scratch + f32 result.
    per_image_block = 2 * (C_in_p * L * itemsize + C_out * Qp * out_itemsize)
    per_image_scratch = T * Qp * itemsize + C_out * Qp * 4

    vmem_cap = _vmem_capacity_bytes()
    budget = min(16 << 20, vmem_cap // 4)
    nb_cap = N if N == 1 else max(1, N // 2)      # guarantee >=2 grid steps if N > 1
    Nb = 1
    for cand in range(1, nb_cap + 1):
        if N % cand:
            continue
        if cand * (per_image_block + per_image_scratch) <= budget:
            Nb = cand
    grid = (N // Nb,)

    need = 2 * C_out * T * itemsize + Nb * (per_image_block + per_image_scratch)
    vmem_limit = int(min(int(0.85 * vmem_cap),
                         max(2 * need + (2 << 20), 16 << 20)))

    flops = 2 * N * C_out * Qp * T
    bytes_accessed = int(xf.size * itemsize + wc.size * itemsize
                         + N * C_out * Qp * out_itemsize)

    kernel = functools.partial(
        _sepconv_kernel, Nb=Nb, K=K, stride=stride, dilation=dilation,
        Wp=Wp, Qp=Qp, C_in_p=C_in_p)

    out_flat = pl.pallas_call(
        kernel,
        out_shape=jax.ShapeDtypeStruct((N, C_out, Qp), in_dtype),
        grid_spec=pltpu.PrefetchScalarGridSpec(
            num_scalar_prefetch=0,
            grid=grid,
            in_specs=[
                pl.BlockSpec((Nb, C_in_p, L), lambda g: (g, 0, 0)),
                pl.BlockSpec((C_out, T), lambda g: (0, 0)),
            ],
            out_specs=pl.BlockSpec((Nb, C_out, Qp), lambda g: (g, 0, 0)),
            scratch_shapes=[pltpu.VMEM((T, Nb * Qp), compute_dtype)],
        ),
        compiler_params=pltpu.CompilerParams(
            dimension_semantics=("parallel",),
            vmem_limit_bytes=vmem_limit),
        cost_estimate=pl.CostEstimate(flops=flops, transcendentals=0,
                                      bytes_accessed=bytes_accessed),
    )(xf, wc)

    # Un-flatten: q = h*Wp + w.  Pure reshape + crop (no pad pass).
    HW = H_out * Wp
    out = out_flat[:, :, :HW].reshape(N, C_out, H_out, Wp)[:, :, :, :W_out]
    return out


def _reference(x_nchw, w_dw, w_pw, *, stride=1, padding=1, dilation=1):
    """Pure-JAX reference using lax.conv_general_dilated (mirrors torch F.conv2d)."""
    C_in = x_nchw.shape[1]
    dw = lax.conv_general_dilated(
        x_nchw, w_dw,
        window_strides=(stride, stride),
        padding=((padding, padding), (padding, padding)),
        rhs_dilation=(dilation, dilation),
        dimension_numbers=("NCHW", "OIHW", "NCHW"),
        feature_group_count=C_in)
    return lax.conv_general_dilated(
        dw, w_pw,
        window_strides=(1, 1),
        padding=((0, 0), (0, 0)),
        dimension_numbers=("NCHW", "OIHW", "NCHW"))


if __name__ == "__main__":
    # Small deterministic example consistent with the module:
    # in_channels=4, out_channels=8, kernel_size=3, stride=1, padding=1, bias=False.
    N, C_in, H, W = 2, 4, 16, 16
    C_out, K = 8, 3

    key = jax.random.PRNGKey(0)
    kx, kdw, kpw = jax.random.split(key, 3)
    x = jax.random.normal(kx, (N, C_in, H, W), dtype=jnp.float32)
    w_dw = jax.random.normal(kdw, (C_in, 1, K, K), dtype=jnp.float32) * 0.1
    w_pw = jax.random.normal(kpw, (C_out, C_in, 1, 1), dtype=jnp.float32) * 0.1

    out = separable_conv2d(x, w_dw, w_pw, stride=1, padding=1, dilation=1)
    out = jax.block_until_ready(out)

    ref = _reference(x, w_dw, w_pw, stride=1, padding=1, dilation=1)
    assert out.shape == (N, C_out, H, W), out.shape
    assert jnp.allclose(out, ref, atol=1e-4, rtol=1e-4), "mismatch vs reference"

    print("KERNEL_OK")
</pallas_src>

<mosaic_0001>
module attributes {stable_mosaic.version = 11 : i64} {
  func.func @_sepconv_kernel(%arg0: i32, %arg1: memref<1x8x432xf32, #tpu.memory_space<vmem>>, %arg2: memref<8x72xf32, #tpu.memory_space<vmem>>, %arg3: memref<1x8x384xf32, #tpu.memory_space<vmem>>, %arg4: memref<72x384xf32, #tpu.memory_space<vmem>>) attributes {dimension_semantics = [#tpu.dimension_semantics<parallel>], iteration_bounds = array<i64: 2>, scalar_prefetch = 0 : i64, scratch_operands = 1 : i64, tpu.core_type = #tpu.core_type<tc>, window_params = [{transform_indices = @transform_0, window_bounds = array<i64: 1, 8, 432>}, {pipeline_mode = #tpu.pipeline_mode<synchronous>, transform_indices = @transform_1, window_bounds = array<i64: 8, 72>}, {transform_indices = @transform_2, window_bounds = array<i64: 1, 8, 384>}]} {
    %c0 = arith.constant 0 : index
    %c0_0 = arith.constant 0 : index
    %c0_1 = arith.constant 0 : index
    %0 = vector.load %arg1[%c0, %c0_0, %c0_1] : memref<1x8x432xf32, #tpu.memory_space<vmem>>, vector<1x8x384xf32>
    %1 = vector.shape_cast %0 : vector<1x8x384xf32> to vector<8x384xf32>
    %c0_2 = arith.constant 0 : index
    %c0_3 = arith.constant 0 : index
    %2 = vector.load %arg4[%c0_2, %c0_3] : memref<72x384xf32, #tpu.memory_space<vmem>>, vector<8x384xf32>
    tpu.vector_store %arg4[%c0_2, %c0_3], %1 {strides = array<i32>} : memref<72x384xf32, #tpu.memory_space<vmem>>, vector<8x384xf32>,
    %c0_4 = arith.constant 0 : index
    %c0_5 = arith.constant 0 : index
    %c1 = arith.constant 1 : index
    %3 = vector.load %arg1[%c0_4, %c0_5, %c1] : memref<1x8x432xf32, #tpu.memory_space<vmem>>, vector<1x8x384xf32>
    %4 = vector.shape_cast %3 : vector<1x8x384xf32> to vector<8x384xf32>
    %c8 = arith.constant 8 : index
    %c0_6 = arith.constant 0 : index
    %5 = vector.load %arg4[%c8, %c0_6] : memref<72x384xf32, #tpu.memory_space<vmem>>, vector<8x384xf32>
    tpu.vector_store %arg4[%c8, %c0_6], %4 {strides = array<i32>} : memref<72x384xf32, #tpu.memory_space<vmem>>, vector<8x384xf32>,
    %c0_7 = arith.constant 0 : index
    %c0_8 = arith.constant 0 : index
    %c2 = arith.constant 2 : index
    %6 = vector.load %arg1[%c0_7, %c0_8, %c2] : memref<1x8x432xf32, #tpu.memory_space<vmem>>, vector<1x8x384xf32>
    %7 = vector.shape_cast %6 : vector<1x8x384xf32> to vector<8x384xf32>
    %c16 = arith.constant 16 : index
    %c0_9 = arith.constant 0 : index
    %8 = vector.load %arg4[%c16, %c0_9] : memref<72x384xf32, #tpu.memory_space<vmem>>, vector<8x384xf32>
    tpu.vector_store %arg4[%c16, %c0_9], %7 {strides = array<i32>} : memref<72x384xf32, #tpu.memory_space<vmem>>, vector<8x384xf32>,
    %c0_10 = arith.constant 0 : index
    %c0_11 = arith.constant 0 : index
    %c18 = arith.constant 18 : index
    %9 = vector.load %arg1[%c0_10, %c0_11, %c18] : memref<1x8x432xf32, #tpu.memory_space<vmem>>, vector<1x8x384xf32>
    %10 = vector.shape_cast %9 : vector<1x8x384xf32> to vector<8x384xf32>
    %c24 = arith.constant 24 : index
    %c0_12 = arith.constant 0 : index
    %11 = vector.load %arg4[%c24, %c0_12] : memref<72x384xf32, #tpu.memory_space<vmem>>, vector<8x384xf32>
    tpu.vector_store %arg4[%c24, %c0_12], %10 {strides = array<i32>} : memref<72x384xf32, #tpu.memory_space<vmem>>, vector<8x384xf32>,
    %c0_13 = arith.constant 0 : index
    %c0_14 = arith.constant 0 : index
    %c19 = arith.constant 19 : index
    %12 = vector.load %arg1[%c0_13, %c0_14, %c19] : memref<1x8x432xf32, #tpu.memory_space<vmem>>, vector<1x8x384xf32>
    %13 = vector.shape_cast %12 : vector<1x8x384xf32> to vector<8x384xf32>
    %c32 = arith.constant 32 : index
    %c0_15 = arith.constant 0 : index
    %14 = vector.load %arg4[%c32, %c0_15] : memref<72x384xf32, #tpu.memory_space<vmem>>, vector<8x384xf32>
    tpu.vector_store %arg4[%c32, %c0_15], %13 {strides = array<i32>} : memref<72x384xf32, #tpu.memory_space<vmem>>, vector<8x384xf32>,
    %c0_16 = arith.constant 0 : index
    %c0_17 = arith.constant 0 : index
    %c20 = arith.constant 20 : index
    %15 = vector.load %arg1[%c0_16, %c0_17, %c20] : memref<1x8x432xf32, #tpu.memory_space<vmem>>, vector<1x8x384xf32>
    %16 = vector.shape_cast %15 : vector<1x8x384xf32> to vector<8x384xf32>
    %c40 = arith.constant 40 : index
    %c0_18 = arith.constant 0 : index
    %17 = vector.load %arg4[%c40, %c0_18] : memref<72x384xf32, #tpu.memory_space<vmem>>, vector<8x384xf32>
    tpu.vector_store %arg4[%c40, %c0_18], %16 {strides = array<i32>} : memref<72x384xf32, #tpu.memory_space<vmem>>, vector<8x384xf32>,
    %c0_19 = arith.constant 0 : index
    %c0_20 = arith.constant 0 : index
    %c36 = arith.constant 36 : index
    %18 = vector.load %arg1[%c0_19, %c0_20, %c36] : memref<1x8x432xf32, #tpu.memory_space<vmem>>, vector<1x8x384xf32>
    %19 = vector.shape_cast %18 : vector<1x8x384xf32> to vector<8x384xf32>
    %c48 = arith.constant 48 : index
    %c0_21 = arith.constant 0 : index
    %20 = vector.load %arg4[%c48, %c0_21] : memref<72x384xf32, #tpu.memory_space<vmem>>, vector<8x384xf32>
    tpu.vector_store %arg4[%c48, %c0_21], %19 {strides = array<i32>} : memref<72x384xf32, #tpu.memory_space<vmem>>, vector<8x384xf32>,
    %c0_22 = arith.constant 0 : index
    %c0_23 = arith.constant 0 : index
    %c37 = arith.constant 37 : index
    %21 = vector.load %arg1[%c0_22, %c0_23, %c37] : memref<1x8x432xf32, #tpu.memory_space<vmem>>, vector<1x8x384xf32>
    %22 = vector.shape_cast %21 : vector<1x8x384xf32> to vector<8x384xf32>
    %c56 = arith.constant 56 : index
    %c0_24 = arith.constant 0 : index
    %23 = vector.load %arg4[%c56, %c0_24] : memref<72x384xf32, #tpu.memory_space<vmem>>, vector<8x384xf32>
    tpu.vector_store %arg4[%c56, %c0_24], %22 {strides = array<i32>} : memref<72x384xf32, #tpu.memory_space<vmem>>, vector<8x384xf32>,
    %c0_25 = arith.constant 0 : index
    %c0_26 = arith.constant 0 : index
    %c38 = arith.constant 38 : index
    %24 = vector.load %arg1[%c0_25, %c0_26, %c38] : memref<1x8x432xf32, #tpu.memory_space<vmem>>, vector<1x8x384xf32>
    %25 = vector.shape_cast %24 : vector<1x8x384xf32> to vector<8x384xf32>
    %c64 = arith.constant 64 : index
    %c0_27 = arith.constant 0 : index
    %26 = vector.load %arg4[%c64, %c0_27] : memref<72x384xf32, #tpu.memory_space<vmem>>, vector<8x384xf32>
    tpu.vector_store %arg4[%c64, %c0_27], %25 {strides = array<i32>} : memref<72x384xf32, #tpu.memory_space<vmem>>, vector<8x384xf32>,
    %c0_28 = arith.constant 0 : index
    %c0_29 = arith.constant 0 : index
    %27 = vector.load %arg2[%c0_28, %c0_29] : memref<8x72xf32, #tpu.memory_space<vmem>>, vector<8x72xf32>
    %c0_30 = arith.constant 0 : index
    %c0_31 = arith.constant 0 : index
    %28 = vector.load %arg4[%c0_30, %c0_31] : memref<72x384xf32, #tpu.memory_space<vmem>>, vector<72x384xf32>
    %cst = arith.constant dense<0.000000e+00> : vector<8x384xf32>
    %29 = tpu.matmul %27, %28, %cst {dimension_numbers = #tpu.dot_dimension_numbers<[1], [0], [0], [1], [0, 0, 1, 1], [], []>} : vector<8x72xf32>, vector<72x384xf32>, vector<8x384xf32> -> vector<8x384xf32>
    %c0_32 = arith.constant 0 : index
    %c0_33 = arith.constant 0 : index
    %c0_34 = arith.constant 0 : index
    %30 = vector.load %arg3[%c0_32, %c0_33, %c0_34] : memref<1x8x384xf32, #tpu.memory_space<vmem>>, vector<1x8x384xf32>
    %31 = vector.shape_cast %30 : vector<1x8x384xf32> to vector<8x384xf32>
    %32 = vector.shape_cast %29 : vector<8x384xf32> to vector<1x8x384xf32>
    tpu.vector_store %arg3[%c0_32, %c0_33, %c0_34], %32 {strides = array<i32>} : memref<1x8x384xf32, #tpu.memory_space<vmem>>, vector<1x8x384xf32>,
    return
  }
  func.func @transform_0(%arg0: i32) -> (i32, i32, i32) {
    %c0_i32 = arith.constant 0 : i32
    %c0_i32_0 = arith.constant 0 : i32
    %c0_i32_1 = arith.constant 0 : i32
    return %arg0, %c0_i32, %c0_i32_0 : i32, i32, i32
  }
  func.func @transform_1(%arg0: i32) -> (i32, i32) {
    %c0_i32 = arith.constant 0 : i32
    %c0_i32_0 = arith.constant 0 : i32
    %c0_i32_1 = arith.constant 0 : i32
    return %c0_i32, %c0_i32_0 : i32, i32
  }
  func.func @transform_2(%arg0: i32) -> (i32, i32, i32) {
    %c0_i32 = arith.constant 0 : i32
    %c0_i32_0 = arith.constant 0 : i32
    %c0_i32_1 = arith.constant 0 : i32
    return %arg0, %c0_i32, %c0_i32_0 : i32, i32, i32
  }
}

</mosaic_0001>

<llo_original>
// kernel: tpu_custom_call.1
$region0: #{tpu_custom_call.1}
  #allocation0 [shape = 'u32[]', space=smem, size = 0x4, offset = 0x4, fixed_abs, tag = 'smem constant byte address 0x4 - core index']
  #allocation1 [shape = 'u32[144,128]{1,0:T(1,128)}', space=vmem, size = 0x12000, scoped, tag = 'internal scratch']
  #allocation2 [shape = 'f32[72,384]{1,0:T(8,128)}', space=vmem, size = 0x1b000, scoped, tag = 'scratch operand']
  %s0 = inlined_call_operand.hbm [shape: f32[2,8,432], index: 0, kind: input, shape index: {}]
  %s1 = inlined_call_operand.hbm [shape: f32[8,72], index: 1, kind: input, shape index: {}]
  %s2 = inlined_call_operand.hbm [shape: f32[2,8,384], index: 2, kind: output, shape index: {}]
  %s3 = sld [smem:[#allocation0]]
  $region49: #{tpu_custom_call.1} parent=0
    _
  %s5 = ssub.s32 1, %s3
  %s6 = scalar_select 0, %s5, %s3
  $region1: #{tpu_custom_call.1} parent=0
    #allocation3 [shape = 'u8[32768]{0}', space=vmem, size = 0x8000, scoped, tag = 'input window, operand 0']
    #allocation4 [shape = 's32[2]{0}', space=sflag, size = 0x8, scoped, tag = 'scoped memory for tpu_custom_call.1']
    #allocation5 [shape = 's32[2]{0}', space=sflag, size = 0x8, scoped, tag = 'scoped memory for tpu_custom_call.1']
    #allocation6 [shape = 'u8[4096]{0}', space=vmem, size = 0x1000, scoped, tag = 'input window, operand 1, single buffered']
    #allocation7 [shape = 's32[1]{0}', space=sflag, size = 0x4, scoped, tag = 'scoped memory for tpu_custom_call.1']
    #allocation8 [shape = 'u8[24576]{0}', space=vmem, size = 0x6000, scoped, tag = 'output window, operand 0']
    %7 = vsyncpa [#allocation4], 0
    %s8 = scalar_lea.sflag [#allocation4], 1
    %9 = vsyncpa %s8, 0
    %10 = vsyncpa [#allocation7], 0
    %11 = vsyncpa [#allocation5], 0
    %s12 = scalar_lea.sflag [#allocation5], 1
    %13 = vsyncpa %s12, 0
    loop: start=0, step=1, limit=4
    $region2: #{tpu_custom_call.1} parent=1 // loop_pre_header
      _
    $region3: #{tpu_custom_call.1} parent=1 // loop_header
      %s15 = sphi 0, %s19
      %p16 = scmp.ge.s32.totalorder %s15, 4
      %s25 = sphi 0, %s27
      %s28 = sphi 0, %s25
      %s29 = sphi 0, %s28
      %s45 = sphi 0, %s29
      %s49 = sphi 0, %s49
      %s51 = sphi 0, %s49
      %s52 = sphi 0, %s51
      %s66 = sphi 0, %s52
      %s72 = sphi 0, %s74
      %s75 = sphi 0, %s72
      %s76 = sphi 0, %s75
      %s92 = sphi 0, %s76
    $region4: #{tpu_custom_call.1} parent=1 // loop_header_branch
      %18 = sbr.rel (%p16) target = $region8
    $region5: #{tpu_custom_call.1} parent=1 // loop_body
      %s20 = ssub.s32 %s15, 1
      %s21 = ssub.s32 %s15, 2
      %s22 = sadd.s32 %s15, 1
      %s23 = ssub.s32 %s15, %s22
      %p24 = scmp.eq.s32.totalorder %s23, 0
      %s26 = sadd.s32 %s25, 1
      %s27 = scalar_select %p24, %s25, %s26
      %p30 = pneg %p24
      %p31 = scmp.eq.s32.totalorder %s15, 1
      %p32 = por %p30, %p31
      %p33 = scmp.ne.s32.totalorder %s25, %s28
      %p34 = scmp.eq.s32.totalorder %s15, 0
      %p35 = por %p33, %p34
      %p36 = scmp.ne.s32.totalorder %s25, %s28
      %p37 = scmp.eq.s32.totalorder %s20, 1
      %p38 = por %p36, %p37
      %p39 = scmp.ne.s32.totalorder %s28, %s29
      %p40 = scmp.eq.s32.totalorder %s20, 0
      %p41 = por %p39, %p40
      %p42 = scmp.ne.s32.totalorder %s28, %s29
      %p43 = scmp.eq.s32.totalorder %s21, 1
      %p44 = por %p42, %p43
      %p46 = scmp.ne.s32.totalorder %s29, %s45
      %p47 = scmp.eq.s32.totalorder %s21, 0
      %p48 = por %p46, %p47
      %s50 = sadd.s32 %s49, 1
      %p53 = scmp.eq.s32.totalorder %s15, 1
      %p54 = scmp.ne.s32.totalorder %s49, %s51
      %p55 = scmp.eq.s32.totalorder %s15, 0
      %p56 = por %p54, %p55
      %p57 = scmp.ne.s32.totalorder %s49, %s51
      %p58 = scmp.eq.s32.totalorder %s20, 1
      %p59 = por %p57, %p58
      %p60 = scmp.ne.s32.totalorder %s51, %s52
      %p61 = scmp.eq.s32.totalorder %s20, 0
      %p62 = por %p60, %p61
      %p63 = scmp.ne.s32.totalorder %s51, %s52
      %p64 = scmp.eq.s32.totalorder %s21, 1
      %p65 = por %p63, %p64
      %p67 = scmp.ne.s32.totalorder %s52, %s66
      %p68 = scmp.eq.s32.totalorder %s21, 0
      %p69 = por %p67, %p68
      %s70 = ssub.s32 %s15, %s22
      %p71 = scmp.eq.s32.totalorder %s70, 0
      %s73 = sadd.s32 %s72, 1
      %s74 = scalar_select %p71, %s72, %s73
      %p77 = pneg %p71
      %p78 = scmp.eq.s32.totalorder %s15, 1
      %p79 = por %p77, %p78
      %p80 = scmp.ne.s32.totalorder %s72, %s75
      %p81 = scmp.eq.s32.totalorder %s15, 0
      %p82 = por %p80, %p81
      %p83 = scmp.ne.s32.totalorder %s72, %s75
      %p84 = scmp.eq.s32.totalorder %s20, 1
      %p85 = por %p83, %p84
      %p86 = scmp.ne.s32.totalorder %s75, %s76
      %p87 = scmp.eq.s32.totalorder %s20, 0
      %p88 = por %p86, %p87
      %p89 = scmp.ne.s32.totalorder %s75, %s76
      %p90 = scmp.eq.s32.totalorder %s21, 1
      %p91 = por %p89, %p90
      %p93 = scmp.ne.s32.totalorder %s76, %s92
      %p94 = scmp.eq.s32.totalorder %s21, 0
      %p95 = por %p93, %p94
      %p96 = scmp.le.s32.totalorder 1, %s15
      %p97 = scmp.lt.s32.totalorder %s15, 3
      %p98 = pnand %p96, %p97
      %p99 = pneg %p98
      // Predicated region
      $region9: #{tpu_custom_call.1} parent=5 // pred_check
        _
      $region10: #{tpu_custom_call.1} parent=5 // pred_check_branch
        %101 = sbr.rel (%p98) target = $region12
      $region11: #{tpu_custom_call.1} parent=5 // pred_region
        %s102 = ssub.s32 %s15, 1
        // Predicated region
        $region13: #{tpu_custom_call.1} parent=11 // pred_check
          %p103 = pneg %p62
        $region14: #{tpu_custom_call.1} parent=11 // pred_check_branch
          %105 = sbr.rel (%p103) target = $region16
        $region15: #{tpu_custom_call.1} parent=11 // pred_region
          %s107 = ssub.s32 128, 128
          %108 = vsyncadd [#allocation7], %s107
          %s110 = sshll.u32 [#allocation6], 4
          %s111 = int_to_ptr.vmem [resolvable:$true] %s110
          %113 = dma.hbm_to_vmem [thread:$0]  %s1, 128, %s111, [#allocation7]
        $region16: #{tpu_custom_call.1} parent=11 // pred_fallthru
          _
      $region12: #{tpu_custom_call.1} parent=5 // pred_fallthru
        _
      %p114 = scmp.lt.s32.totalorder %s15, 2
      // Predicated region
      $region17: #{tpu_custom_call.1} parent=5 // pred_check
        %p115 = pneg %p114
      $region18: #{tpu_custom_call.1} parent=5 // pred_check_branch
        %117 = sbr.rel (%p115) target = $region20
      $region19: #{tpu_custom_call.1} parent=5 // pred_region
        // Predicated region
        $region21: #{tpu_custom_call.1} parent=19 // pred_check
          %p118 = pneg %p35
        $region22: #{tpu_custom_call.1} parent=19 // pred_check_branch
          %120 = sbr.rel (%p118) target = $region24
        $region23: #{tpu_custom_call.1} parent=19 // pred_region
          %s121 = sand.u32 %s25, 1
          %s122 = scalar_lea.sflag [#allocation4], %s121
          %s123 = sand.u32 %s25, 1
          %s124 = smul.addr %s123, 32
          %s125 = scalar_lea.vmem [#allocation3], %s124
          %s127 = ssub.s32 512, 512
          %128 = vsyncadd %s122, %s127
          %s129 = smul.addr %s15, 4
          %s130 = smul.addr %s129, 128
          %s131 = scalar_lea.hbm %s0, %s130
          %s133 = sshll.u32 %s125, 4
          %s134 = int_to_ptr.vmem [resolvable:$true] %s133
          %136 = dma.hbm_to_vmem [thread:$0]  %s131, 512, %s134, %s122
        $region24: #{tpu_custom_call.1} parent=19 // pred_fallthru
          _
      $region20: #{tpu_custom_call.1} parent=5 // pred_fallthru
        _
      %p137 = scmp.le.s32.totalorder 1, %s15
      %p138 = scmp.lt.s32.totalorder %s15, 3
      %p139 = pnand %p137, %p138
      %p140 = pneg %p139
      // Predicated region
      $region25: #{tpu_custom_call.1} parent=5 // pred_check
        _
      $region26: #{tpu_custom_call.1} parent=5 // pred_check_branch
        %142 = sbr.rel (%p139) target = $region28
      $region27: #{tpu_custom_call.1} parent=5 // pred_region
        %s143 = ssub.s32 %s15, 1
        %s144 = sand.u32 %s28, 1
        %s145 = scalar_lea.sflag [#allocation4], %s144
        %s146 = sand.u32 %s28, 1
        %s147 = smul.addr %s146, 32
        %s148 = scalar_lea.vmem [#allocation3], %s147
        // Predicated region
        $region29: #{tpu_custom_call.1} parent=27 // pred_check
          %p149 = pneg %p41
        $region30: #{tpu_custom_call.1} parent=27 // pred_check_branch
          %151 = sbr.rel (%p149) target = $region32
        $region31: #{tpu_custom_call.1} parent=27 // pred_region
          %152 = dma.done %s145, 512
        $region32: #{tpu_custom_call.1} parent=27 // pred_fallthru
          _
        // Predicated region
        $region33: #{tpu_custom_call.1} parent=27 // pred_check
          %p153 = pneg %p62
        $region34: #{tpu_custom_call.1} parent=27 // pred_check_branch
          %155 = sbr.rel (%p153) target = $region36
        $region35: #{tpu_custom_call.1} parent=27 // pred_region
          %156 = dma.done [#allocation7], 128
        $region36: #{tpu_custom_call.1} parent=27 // pred_fallthru
          _
        %s157 = sand.u32 %s28, 1
        %s158 = scalar_lea.sflag [#allocation4], %s157
        %s159 = sand.u32 %s28, 1
        %s160 = smul.addr %s159, 32
        %s161 = scalar_lea.vmem [#allocation3], %s160
        %p162 = pneg %p41
        %p163 = pneg %p38
        %p164 = pneg %p62
        %p165 = pneg %p59
        %p166 = pneg %p88
        %p167 = pneg %p85
        %s168 = sand.u32 %s75, 1
        %s169 = scalar_lea.sflag [#allocation5], %s168
        %s170 = sand.u32 %s75, 1
        %s171 = smul.addr %s170, 24
        %s172 = scalar_lea.vmem [#allocation8], %s171
        %v173 = vld [vmem:[%s148] sm:$0xff]
        %v174 = vld [vmem:[%s148 + $0x8] sm:$0xff]
        %v175 = vld [vmem:[%s148 + $0x10] sm:$0xff]
        %176 = vst [vmem:[#allocation2] sm:$0xff] %v173
        %177 = vst [vmem:[#allocation2 + $0x8] sm:$0xff] %v174
        %178 = vst [vmem:[#allocation2 + $0x10] sm:$0xff] %v175
        %v179 = vld [vmem:[%s148] sm:$0xff]
        %v180 = vld [vmem:[%s148 + $0x8] sm:$0xff]
        %v181 = vld [vmem:[%s148 + $0x10] sm:$0xff]
        %v182 = vld [vmem:[%s148 + $0x18] sm:$0xff]
        %187 = vrot.lane.b32.xlu0 %v179, 127
        %v188 = vpop.permute.xlu0 %187
        %189 = vrot.lane.b32.xlu0 %v180, 127
        %v190 = vpop.permute.xlu0 %189
        %191 = vrot.lane.b32.xlu0 %v181, 127
        %v192 = vpop.permute.xlu0 %191
        %193 = vrot.lane.b32.xlu0 %v182, 127
        %v194 = vpop.permute.xlu0 %193
        %vm195 = vcmask 1039360
        %v196 = vsel %vm195, %v188, %v190
        %v197 = vsel %vm195, %v190, %v192
        %v198 = vsel %vm195, %v192, %v194
        %202 = vst [vmem:[#allocation2 + $0x18] sm:$0xff] %v196
        %203 = vst [vmem:[#allocation2 + $0x20] sm:$0xff] %v197
        %204 = vst [vmem:[#allocation2 + $0x28] sm:$0xff] %v198
        %v205 = vld [vmem:[%s148] sm:$0xff]
        %v206 = vld [vmem:[%s148 + $0x8] sm:$0xff]
        %v207 = vld [vmem:[%s148 + $0x10] sm:$0xff]
        %v208 = vld [vmem:[%s148 + $0x18] sm:$0xff]
        %213 = vrot.lane.b32.xlu0 %v205, 126
        %v214 = vpop.permute.xlu0 %213
        %215 = vrot.lane.b32.xlu0 %v206, 126
        %v216 = vpop.permute.xlu0 %215
        %217 = vrot.lane.b32.xlu0 %v207, 126
        %v218 = vpop.permute.xlu0 %217
        %219 = vrot.lane.b32.xlu0 %v208, 126
        %v220 = vpop.permute.xlu0 %219
        %vm221 = vcmask 1031168
        %v222 = vsel %vm221, %v214, %v216
        %v223 = vsel %vm221, %v216, %v218
        %v224 = vsel %vm221, %v218, %v220
        %228 = vst [vmem:[#allocation2 + $0x30] sm:$0xff] %v222
        %229 = vst [vmem:[#allocation2 + $0x38] sm:$0xff] %v223
        %230 = vst [vmem:[#allocation2 + $0x40] sm:$0xff] %v224
        %v231 = vld [vmem:[%s148] sm:$0xff]
        %v232 = vld [vmem:[%s148 + $0x8] sm:$0xff]
        %v233 = vld [vmem:[%s148 + $0x10] sm:$0xff]
        %v234 = vld [vmem:[%s148 + $0x18] sm:$0xff]
        %239 = vrot.lane.b32.xlu0 %v231, 110
        %v240 = vpop.permute.xlu0 %239
        %241 = vrot.lane.b32.xlu0 %v232, 110
        %v242 = vpop.permute.xlu0 %241
        %243 = vrot.lane.b32.xlu0 %v233, 110
        %v244 = vpop.permute.xlu0 %243
        %245 = vrot.lane.b32.xlu0 %v234, 110
        %v246 = vpop.permute.xlu0 %245
        %vm247 = vcmask 900096
        %v248 = vsel %vm247, %v240, %v242
        %v249 = vsel %vm247, %v242, %v244
        %v250 = vsel %vm247, %v244, %v246
        %254 = vst [vmem:[#allocation2 + $0x48] sm:$0xff] %v248
        %255 = vst [vmem:[#allocation2 + $0x50] sm:$0xff] %v249
        %256 = vst [vmem:[#allocation2 + $0x58] sm:$0xff] %v250
        %v257 = vld [vmem:[%s148] sm:$0xff]
        %v258 = vld [vmem:[%s148 + $0x8] sm:$0xff]
        %v259 = vld [vmem:[%s148 + $0x10] sm:$0xff]
        %v260 = vld [vmem:[%s148 + $0x18] sm:$0xff]
        %265 = vrot.lane.b32.xlu0 %v257, 109
        %v266 = vpop.permute.xlu0 %265
        %267 = vrot.lane.b32.xlu0 %v258, 109
        %v268 = vpop.permute.xlu0 %267
        %269 = vrot.lane.b32.xlu0 %v259, 109
        %v270 = vpop.permute.xlu0 %269
        %271 = vrot.lane.b32.xlu0 %v260, 109
        %v272 = vpop.permute.xlu0 %271
        %vm273 = vcmask 891904
        %v274 = vsel %vm273, %v266, %v268
        %v275 = vsel %vm273, %v268, %v270
        %v276 = vsel %vm273, %v270, %v272
        %280 = vst [vmem:[#allocation2 + $0x60] sm:$0xff] %v274
        %281 = vst [vmem:[#allocation2 + $0x68] sm:$0xff] %v275
        %282 = vst [vmem:[#allocation2 + $0x70] sm:$0xff] %v276
        %v283 = vld [vmem:[%s148] sm:$0xff]
        %v284 = vld [vmem:[%s148 + $0x8] sm:$0xff]
        %v285 = vld [vmem:[%s148 + $0x10] sm:$0xff]
        %v286 = vld [vmem:[%s148 + $0x18] sm:$0xff]
        %291 = vrot.lane.b32.xlu0 %v283, 108
        %v292 = vpop.permute.xlu0 %291
        %293 = vrot.lane.b32.xlu0 %v284, 108
        %v294 = vpop.permute.xlu0 %293
        %295 = vrot.lane.b32.xlu0 %v285, 108
        %v296 = vpop.permute.xlu0 %295
        %297 = vrot.lane.b32.xlu0 %v286, 108
        %v298 = vpop.permute.xlu0 %297
        %vm299 = vcmask 883712
        %v300 = vsel %vm299, %v292, %v294
        %v301 = vsel %vm299, %v294, %v296
        %v302 = vsel %vm299, %v296, %v298
        %306 = vst [vmem:[#allocation2 + $0x78] sm:$0xff] %v300
        %307 = vst [vmem:[#allocation2 + $0x80] sm:$0xff] %v301
        %308 = vst [vmem:[#allocation2 + $0x88] sm:$0xff] %v302
        %v309 = vld [vmem:[%s148] sm:$0xff]
        %v310 = vld [vmem:[%s148 + $0x8] sm:$0xff]
        %v311 = vld [vmem:[%s148 + $0x10] sm:$0xff]
        %v312 = vld [vmem:[%s148 + $0x18] sm:$0xff]
        %317 = vrot.lane.b32.xlu0 %v309, 92
        %v318 = vpop.permute.xlu0 %317
        %319 = vrot.lane.b32.xlu0 %v310, 92
        %v320 = vpop.permute.xlu0 %319
        %321 = vrot.lane.b32.xlu0 %v311, 92
        %v322 = vpop.permute.xlu0 %321
        %323 = vrot.lane.b32.xlu0 %v312, 92
        %v324 = vpop.permute.xlu0 %323
        %vm325 = vcmask 752640
        %v326 = vsel %vm325, %v318, %v320
        %v327 = vsel %vm325, %v320, %v322
        %v328 = vsel %vm325, %v322, %v324
        %332 = vst [vmem:[#allocation2 + $0x90] sm:$0xff] %v326
        %333 = vst [vmem:[#allocation2 + $0x98] sm:$0xff] %v327
        %334 = vst [vmem:[#allocation2 + $0xa0] sm:$0xff] %v328
        %v335 = vld [vmem:[%s148] sm:$0xff]
        %v336 = vld [vmem:[%s148 + $0x8] sm:$0xff]
        %v337 = vld [vmem:[%s148 + $0x10] sm:$0xff]
        %v338 = vld [vmem:[%s148 + $0x18] sm:$0xff]
        %343 = vrot.lane.b32.xlu0 %v335, 91
        %v344 = vpop.permute.xlu0 %343
        %345 = vrot.lane.b32.xlu0 %v336, 91
        %v346 = vpop.permute.xlu0 %345
        %347 = vrot.lane.b32.xlu0 %v337, 91
        %v348 = vpop.permute.xlu0 %347
        %349 = vrot.lane.b32.xlu0 %v338, 91
        %v350 = vpop.permute.xlu0 %349
        %vm351 = vcmask 744448
        %v352 = vsel %vm351, %v344, %v346
        %v353 = vsel %vm351, %v346, %v348
        %v354 = vsel %vm351, %v348, %v350
        %358 = vst [vmem:[#allocation2 + $0xa8] sm:$0xff] %v352
        %359 = vst [vmem:[#allocation2 + $0xb0] sm:$0xff] %v353
        %360 = vst [vmem:[#allocation2 + $0xb8] sm:$0xff] %v354
        %v361 = vld [vmem:[%s148] sm:$0xff]
        %v362 = vld [vmem:[%s148 + $0x8] sm:$0xff]
        %v363 = vld [vmem:[%s148 + $0x10] sm:$0xff]
        %v364 = vld [vmem:[%s148 + $0x18] sm:$0xff]
        %369 = vrot.lane.b32.xlu0 %v361, 90
        %v370 = vpop.permute.xlu0 %369
        %371 = vrot.lane.b32.xlu0 %v362, 90
        %v372 = vpop.permute.xlu0 %371
        %373 = vrot.lane.b32.xlu0 %v363, 90
        %v374 = vpop.permute.xlu0 %373
        %375 = vrot.lane.b32.xlu0 %v364, 90
        %v376 = vpop.permute.xlu0 %375
        %vm377 = vcmask 736256
        %v378 = vsel %vm377, %v370, %v372
        %v379 = vsel %vm377, %v372, %v374
        %v380 = vsel %vm377, %v374, %v376
        %384 = vst [vmem:[#allocation2 + $0xc0] sm:$0xff] %v378
        %385 = vst [vmem:[#allocation2 + $0xc8] sm:$0xff] %v379
        %386 = vst [vmem:[#allocation2 + $0xd0] sm:$0xff] %v380
        %v387 = vld [vmem:[#allocation6] sm:$0xff]
        %v388 = vld [vmem:[#allocation2] sm:$0xff]
        %v389 = vld [vmem:[#allocation2 + $0x8] sm:$0xff]
        %v390 = vld [vmem:[#allocation2 + $0x10] sm:$0xff]
        %v391 = vld [vmem:[#allocation2 + $0x18] sm:$0xff]
        %v392 = vld [vmem:[#allocation2 + $0x20] sm:$0xff]
        %v393 = vld [vmem:[#allocation2 + $0x28] sm:$0xff]
        %v394 = vld [vmem:[#allocation2 + $0x30] sm:$0xff]
        %v395 = vld [vmem:[#allocation2 + $0x38] sm:$0xff]
        %v396 = vld [vmem:[#allocation2 + $0x40] sm:$0xff]
        %v397 = vld [vmem:[#allocation2 + $0x48] sm:$0xff]
        %v398 = vld [vmem:[#allocation2 + $0x50] sm:$0xff]
        %v399 = vld [vmem:[#allocation2 + $0x58] sm:$0xff]
        %v400 = vld [vmem:[#allocation2 + $0x60] sm:$0xff]
        %v401 = vld [vmem:[#allocation2 + $0x68] sm:$0xff]
        %v402 = vld [vmem:[#allocation2 + $0x70] sm:$0xff]
        %v403 = vld [vmem:[#allocation2 + $0x78] sm:$0xff]
        %v404 = vld [vmem:[#allocation2 + $0x80] sm:$0xff]
        %v405 = vld [vmem:[#allocation2 + $0x88] sm:$0xff]
        %v406 = vld [vmem:[#allocation2 + $0x90] sm:$0xff]
        %v407 = vld [vmem:[#allocation2 + $0x98] sm:$0xff]
        %v408 = vld [vmem:[#allocation2 + $0xa0] sm:$0xff]
        %v409 = vld [vmem:[#allocation2 + $0xa8] sm:$0xff]
        %v410 = vld [vmem:[#allocation2 + $0xb0] sm:$0xff]
        %v411 = vld [vmem:[#allocation2 + $0xb8] sm:$0xff]
        %v412 = vld [vmem:[#allocation2 + $0xc0] sm:$0xff]
        %v413 = vld [vmem:[#allocation2 + $0xc8] sm:$0xff]
        %v414 = vld [vmem:[#allocation2 + $0xd0] sm:$0xff]
        %vm415 = vcmask 588800
        %v417 = vsel %vm415, %v387, 0
        %419 = vmatprep.subr.mxu0 %v389
        %420 = vmatpush1.msra.mxu0 %v388
        %421 = vmatprep.subr.mxu0 %v392
        %422 = vmatpush1.msra.mxu0 %v391
        %423 = vmatprep.subr.mxu0 %v395
        %424 = vmatpush1.msra.mxu0 %v394
        %425 = vmatprep.subr.mxu0 %v398
        %426 = vmatpush1.msra.mxu0 %v397
        %427 = vmatprep.subr.mxu0 %v401
        %428 = vmatpush1.msra.mxu0 %v400
        %429 = vmatprep.subr.mxu0 %v404
        %430 = vmatpush1.msra.mxu0 %v403
        %431 = vmatprep.subr.mxu0 %v407
        %432 = vmatpush1.msra.mxu0 %v406
        %433 = vmatprep.subr.mxu0 %v410
        %434 = vmatpush1.msra.mxu0 %v409
        %435 = vmatprep.subr.mxu0 %v413
        %436 = vmatpush1.msra.mxu0 %v412
        %437 = vmatprep.subr.mxu0 0.0
        %438 = vmatpush1.msra.mxu0 0.0
        %439 = vmatprep.subr.mxu0 0.0
        %440 = vmatpush1.msra.mxu0 0.0
        %441 = vmatprep.subr.mxu0 0.0
        %442 = vmatpush1.msra.mxu0 0.0
        %443 = vmatprep.subr.mxu0 0.0
        %444 = vmatpush1.msra.mxu0 0.0
        %445 = vmatprep.subr.mxu0 0.0
        %446 = vmatpush1.msra.mxu0 0.0
        %447 = vmatprep.subr.mxu0 0.0
        %448 = vmatpush1.msra.mxu0 0.0
        %449 = vmatprep.subr.mxu0 0.0
        %450 = vmatpush1.msra.mxu0 0.0
        %451 = vmatprep.subr.mxu0 0.0
        %452 = vmatpush1.msra.mxu0 0.0
        %453 = vmatprep.subr.mxu0 0.0
        %454 = vmatpush1.msra.mxu0 0.0
        %455 = vmatprep.subr.mxu0 0.0
        %456 = vmatpush1.msra.mxu0 0.0
        %457 = vmatprep.subr.mxu0 0.0
        %458 = vmatpush1.msra.mxu0 0.0
        %459 = vmatprep.subr.mxu0 0.0
        %460 = vmatpush1.msra.mxu0 0.0
        %461 = vmatprep.subr.mxu0 0.0
        %462 = vmatpush1.msra.mxu0 0.0
        %463 = vmatprep.subr.mxu0 0.0
        %464 = vmatpush1.msra.mxu0 0.0
        %465 = vmatprep.subr.mxu0 0.0
        %466 = vmatpush1.msra.mxu0 0.0
        %467 = vmatprep.subr.mxu0 0.0
        %468 = vmatpush1.msra.mxu0 0.0
        %469 = vmatprep.subr.mxu0 0.0
        %470 = vmatpush1.msra.mxu0 0.0
        %471 = vmatprep.subr.mxu0 0.0
        %472 = vmatpush1.msra.mxu0 0.0
        %473 = vmatprep.subr.mxu0 0.0
        %474 = vmatpush1.msra.mxu0 0.0
        %475 = vmatprep.subr.mxu0 0.0
        %476 = vmatpush1.msra.mxu0 0.0
        %477 = vmatprep.subr.mxu0 0.0
        %478 = vmatpush1.msra.mxu0 0.0
        %479 = vmatprep.subr.mxu0 0.0
        %480 = vmatpush1.msra.mxu0 0.0
        %481 = vmatprep.subr.mxu0 0.0
        %482 = vmatpush1.msra.mxu0 0.0
        %483 = vmatprep.mubr.f32.mxu0 0.0
        %484 = vmatmul.mubr.f32.gmra.mrb[0].mxu0 %v417
        %v485 = vpop.f32.mrb[0].mxu0
        %v486 = vadd.f32 0.0, %v485
        %v487 = vpop.f32.mrb[0].mxu0
        %v488 = vadd.f32 0.0, %v487
        %489 = vdwg.mxu0
        %490 = vmatprep.subr.mxu0 0.0
        %491 = vmatpush1.msra.mxu0 %v390
        %492 = vmatprep.subr.mxu0 0.0
        %493 = vmatpush1.msra.mxu0 %v393
        %494 = vmatprep.subr.mxu0 0.0
        %495 = vmatpush1.msra.mxu0 %v396
        %496 = vmatprep.subr.mxu0 0.0
        %497 = vmatpush1.msra.mxu0 %v399
        %498 = vmatprep.subr.mxu0 0.0
        %499 = vmatpush1.msra.mxu0 %v402
        %500 = vmatprep.subr.mxu0 0.0
        %501 = vmatpush1.msra.mxu0 %v405
        %502 = vmatprep.subr.mxu0 0.0
        %503 = vmatpush1.msra.mxu0 %v408
        %504 = vmatprep.subr.mxu0 0.0
        %505 = vmatpush1.msra.mxu0 %v411
        %506 = vmatprep.subr.mxu0 0.0
        %507 = vmatpush1.msra.mxu0 %v414
        %508 = vmatprep.subr.mxu0 0.0
        %509 = vmatpush1.msra.mxu0 0.0
        %510 = vmatprep.subr.mxu0 0.0
        %511 = vmatpush1.msra.mxu0 0.0
        %512 = vmatprep.subr.mxu0 0.0
        %513 = vmatpush1.msra.mxu0 0.0
        %514 = vmatprep.subr.mxu0 0.0
        %515 = vmatpush1.msra.mxu0 0.0
        %516 = vmatprep.subr.mxu0 0.0
        %517 = vmatpush1.msra.mxu0 0.0
        %518 = vmatprep.subr.mxu0 0.0
        %519 = vmatpush1.msra.mxu0 0.0
        %520 = vmatprep.subr.mxu0 0.0
        %521 = vmatpush1.msra.mxu0 0.0
        %522 = vmatprep.subr.mxu0 0.0
        %523 = vmatpush1.msra.mxu0 0.0
        %524 = vmatprep.subr.mxu0 0.0
        %525 = vmatpush1.msra.mxu0 0.0
        %526 = vmatprep.subr.mxu0 0.0
        %527 = vmatpush1.msra.mxu0 0.0
        %528 = vmatprep.subr.mxu0 0.0
        %529 = vmatpush1.msra.mxu0 0.0
        %530 = vmatprep.subr.mxu0 0.0
        %531 = vmatpush1.msra.mxu0 0.0
        %532 = vmatprep.subr.mxu0 0.0
        %533 = vmatpush1.msra.mxu0 0.0
        %534 = vmatprep.subr.mxu0 0.0
        %535 = vmatpush1.msra.mxu0 0.0
        %536 = vmatprep.subr.mxu0 0.0
        %537 = vmatpush1.msra.mxu0 0.0
        %538 = vmatprep.subr.mxu0 0.0
        %539 = vmatpush1.msra.mxu0 0.0
        %540 = vmatprep.subr.mxu0 0.0
        %541 = vmatpush1.msra.mxu0 0.0
        %542 = vmatprep.subr.mxu0 0.0
        %543 = vmatpush1.msra.mxu0 0.0
        %544 = vmatprep.subr.mxu0 0.0
        %545 = vmatpush1.msra.mxu0 0.0
        %546 = vmatprep.subr.mxu0 0.0
        %547 = vmatpush1.msra.mxu0 0.0
        %548 = vmatprep.subr.mxu0 0.0
        %549 = vmatpush1.msra.mxu0 0.0
        %550 = vmatprep.subr.mxu0 0.0
        %551 = vmatpush1.msra.mxu0 0.0
        %552 = vmatprep.subr.mxu0 0.0
        %553 = vmatpush1.msra.mxu0 0.0
        %554 = vmatprep.mubr.f32.mxu0 0.0
        %555 = vmatmul.mubr.f32.gmra.mrb[0].mxu0 %v417
        %v556 = vpop.f32.mrb[0].mxu0
        %v557 = vadd.f32 0.0, %v556
        %v558 = vpop.f32.mrb[0].mxu0
        %559 = vdwg.mxu0
        %560 = vst [vmem:[%s172] sm:$0xff] %v486
        %561 = vst [vmem:[%s172 + $0x8] sm:$0xff] %v488
        %562 = vst [vmem:[%s172 + $0x10] sm:$0xff] %v557
        %s563 = sand.u32 %s75, 1
        %s564 = scalar_lea.sflag [#allocation5], %s563
        %s565 = sand.u32 %s75, 1
        %s566 = smul.addr %s565, 24
        %s567 = scalar_lea.vmem [#allocation8], %s566
        // Predicated region
        $region37: #{tpu_custom_call.1} parent=27 // pred_check
          %p568 = pneg %p85
        $region38: #{tpu_custom_call.1} parent=27 // pred_check_branch
          %570 = sbr.rel (%p568) target = $region40
        $region39: #{tpu_custom_call.1} parent=27 // pred_region
          %s572 = ssub.s32 384, 384
          %573 = vsyncadd %s564, %s572
          %s574 = smul.addr %s20, 3
          %s575 = smul.addr %s574, 128
          %s576 = scalar_lea.hbm %s2, %s575
          %s578 = sshll.u32 %s567, 4
          %s579 = int_to_ptr.vmem [resolvable:$true] %s578
          %581 = dma.vmem_to_hbm [thread:$0]  %s579, 384, %s576, %s564
        $region40: #{tpu_custom_call.1} parent=27 // pred_fallthru
          _
      $region28: #{tpu_custom_call.1} parent=5 // pred_fallthru
        _
      %p582 = scmp.le.s32.totalorder 2, %s15
      // Predicated region
      $region41: #{tpu_custom_call.1} parent=5 // pred_check
        %p583 = pneg %p582
      $region42: #{tpu_custom_call.1} parent=5 // pred_check_branch
        %585 = sbr.rel (%p583) target = $region44
      $region43: #{tpu_custom_call.1} parent=5 // pred_region
        %s586 = ssub.s32 %s15, 2
        // Predicated region
        $region45: #{tpu_custom_call.1} parent=43 // pred_check
          %p587 = pneg %p91
        $region46: #{tpu_custom_call.1} parent=43 // pred_check_branch
          %589 = sbr.rel (%p587) target = $region48
        $region47: #{tpu_custom_call.1} parent=43 // pred_region
          %s590 = sand.u32 %s76, 1
          %s591 = scalar_lea.sflag [#allocation5], %s590
          %s592 = sand.u32 %s76, 1
          %s593 = smul.addr %s592, 24
          %s594 = scalar_lea.vmem [#allocation8], %s593
          %595 = dma.done %s591, 384
        $region48: #{tpu_custom_call.1} parent=43 // pred_fallthru
          _
      $region44: #{tpu_custom_call.1} parent=5 // pred_fallthru
        _
    $region6: #{tpu_custom_call.1} parent=1 // loop_footer
      %s19 = sadd.s32 1, %s15
    $region7: #{tpu_custom_call.1} parent=1 // loop_footer_branch
      %14 = sbr.rel target = $region3
    $region8: #{tpu_custom_call.1} parent=1 // loop_exit
      _
    %596 = vsyncpa [#allocation4], 1
    %s597 = scalar_lea.sflag [#allocation4], 1
    %598 = vsyncpa %s597, 1
    %599 = vsyncpa [#allocation7], 1
    %600 = vsyncpa [#allocation5], 1
    %s601 = scalar_lea.sflag [#allocation5], 1
    %602 = vsyncpa %s601, 1

</llo_original>
